<compile_context>
chip_gen: v7x
topology: tpu7x:2x2x1
jax: 0.10.0
libtpu: 0.0.40
codegen_flags: <defaults>
</compile_context>

<pallas_src>
import functools

import jax
import jax.numpy as jnp
from jax import lax
from jax.experimental import pallas as pl
from jax.experimental.pallas import tpu as pltpu

LANES = 128
SUBLANES = 8
TILE = SUBLANES * LANES          # 1024: main-body granularity (rows stay 8-aligned)
CHUNK_ROWS = 1024                # ~512 KiB of f32 elementwise temporaries per chunk
MAX_BLOCK_ROWS = 8192            # 4 MiB f32 per input block (x2 inputs x2 bufs = 16 MiB)
VMEM_LIMIT_BYTES = 48 * 1024 * 1024


def _dice_bce_partials_kernel(n_main, block_rows, emit_partial,
                              p_ref, t_ref, out_ref):
    """Accumulates vreg-shaped partial sums for one (block_rows, 128) tile.

    out_ref block shape (1, 4, 8, 128):
      [0] sum(p*t), [1] sum(p), [2] sum(t), [3] sum(elementwise BCE)
    """
    c = pl.program_id(0)                    # per-TensorCore slot ("parallel")
    k = pl.program_id(1)                    # reduction step ("arbitrary")
    block_id = c * pl.num_programs(1) + k   # logical block number
    block_elems = block_rows * LANES
    # NOTE: int32 index math -> requires n < 2**31 elements (asserted in wrapper).
    block_start = block_id * block_elems

    @pl.when(k == 0)
    def _():
        out_ref[...] = jnp.zeros_like(out_ref)

    # Static chunk schedule: full CHUNK_ROWS chunks plus an 8-aligned remainder.
    chunks = []
    r = 0
    while r < block_rows:
        size = min(CHUNK_ROWS, block_rows - r)
        chunks.append((r, size))
        r += size

    def fold(x, size):  # (size, 128) -> (8, 128): pure VPU adds across vregs
        return jnp.sum(x.reshape(size // SUBLANES, SUBLANES, LANES), axis=0)

    def full_chunk(r0, size):
        # Fast path: every element is valid -> no mask arithmetic at all.
        p = p_ref[pl.ds(r0, size), :].astype(jnp.float32)
        t = t_ref[pl.ds(r0, size), :].astype(jnp.float32)
        # PyTorch's binary_cross_entropy clamps each log term at -100.
        log_p = jnp.maximum(jnp.log(p), -100.0)
        log_1mp = jnp.maximum(jnp.log(1.0 - p), -100.0)
        # -(t*log_p + (1-t)*log_1mp), reassociated to save one VPU multiply.
        # TODO(synk): for hard {0,1} targets a single-log form would halve EUP
        # traffic on v7x, but PyTorch BCE allows soft targets, so keep 2 logs.
        bce = -(t * (log_p - log_1mp) + log_1mp)
        return fold(p * t, size), fold(p, size), fold(t, size), fold(bce, size)

    def masked_chunk(r0, size):
        # Only runs for the (at most one) partial / duplicated block.  Masks
        # out-of-bounds garbage BEFORE the logs so it cannot produce NaNs.
        p_raw = p_ref[pl.ds(r0, size), :].astype(jnp.float32)
        t_raw = t_ref[pl.ds(r0, size), :].astype(jnp.float32)
        row_ids = lax.broadcasted_iota(jnp.int32, (size, LANES), 0)
        lane_ids = lax.broadcasted_iota(jnp.int32, (size, LANES), 1)
        local_idx = row_ids * LANES + lane_ids
        limit = (n_main - r0 * LANES) - block_start
        valid = local_idx < limit
        vf = valid.astype(jnp.float32)
        p = jnp.where(valid, p_raw, 0.0)
        t = jnp.where(valid, t_raw, 0.0)
        p_safe = jnp.where(valid, p_raw, 0.5)
        log_p = jnp.maximum(jnp.log(p_safe), -100.0)
        log_1mp = jnp.maximum(jnp.log(1.0 - p_safe), -100.0)
        bce = -(t * (log_p - log_1mp) + vf * log_1mp)
        return fold(p * t, size), fold(p, size), fold(t, size), fold(bce, size)

    def accumulate(chunk_fn):
        acc = [jnp.zeros((SUBLANES, LANES), jnp.float32) for _ in range(4)]
        for r0, size in chunks:
            parts = chunk_fn(r0, size)
            for j in range(4):
                acc[j] = acc[j] + parts[j]
        for j in range(4):
            out_ref[0, j, :, :] += acc[j]

    if emit_partial:
        is_full = (n_main - block_start) >= block_elems

        @pl.when(is_full)
        def _():
            accumulate(full_chunk)

        @pl.when(jnp.logical_not(is_full))
        def _():
            accumulate(masked_chunk)
    else:
        # Trace-time guarantee: every block is fully valid -> no masked code.
        accumulate(full_chunk)


def _main_partials(p2, t2, n_main, max_block_rows):
    """Launches the kernel; returns [sum(p*t), sum(p), sum(t), sum(bce)]."""
    rows = p2.shape[0]                                  # multiple of SUBLANES
    block_rows = min(max_block_rows, rows)
    total_blocks = pl.cdiv(rows, block_rows)
    # Leading "parallel" axis splits blocks between the two TensorCores on v7x;
    # near-zero cost on single-TC v5e/v6e.
    num_cores = 2 if total_blocks > 1 else 1
    blocks_per_core = pl.cdiv(total_blocks, num_cores)
    block_elems = block_rows * LANES
    # Partial / duplicated blocks exist iff the grid covers more than n_main.
    emit_partial = num_cores * blocks_per_core * block_elems > n_main

    def in_map(c, k):
        # Clamp so duplicated blocks (odd block count split over 2 cores) stay
        # in bounds; their contribution is masked to zero inside the kernel.
        return (jnp.minimum(c * blocks_per_core + k, total_blocks - 1), 0)

    kernel = functools.partial(
        _dice_bce_partials_kernel, n_main, block_rows, emit_partial)

    partials = pl.pallas_call(
        kernel,
        out_shape=jax.ShapeDtypeStruct((num_cores, 4, SUBLANES, LANES),
                                       jnp.float32),
        grid_spec=pltpu.PrefetchScalarGridSpec(
            num_scalar_prefetch=0,
            grid=(num_cores, blocks_per_core),
            in_specs=[
                pl.BlockSpec((block_rows, LANES), in_map),
                pl.BlockSpec((block_rows, LANES), in_map),
            ],
            out_specs=pl.BlockSpec((1, 4, SUBLANES, LANES),
                                   lambda c, k: (c, 0, 0, 0)),
        ),
        compiler_params=pltpu.CompilerParams(
            dimension_semantics=("parallel", "arbitrary"),
            vmem_limit_bytes=VMEM_LIMIT_BYTES),
    )(p2, t2)

    # Tiny epilogue: cross-core + cross-lane reductions of the (·,4,8,128) slab.
    return jnp.sum(partials, axis=(0, 2, 3))            # (4,)


def dice_bce_loss(y_pred, y_true, *, max_block_rows=MAX_BLOCK_ROWS):
    """0.5 * (1 - dice_coef) + 0.5 * BCE(mean), matching my_loss.forward."""
    assert y_pred.shape == y_true.shape
    assert max_block_rows % SUBLANES == 0
    flat_p = y_pred.reshape(-1)   # native dtype (f32 or bf16); cast is in-kernel
    flat_t = y_true.reshape(-1)
    n = flat_p.shape[0]
    assert n < 2 ** 31, "int32 index math inside the kernel"

    # Main body: largest prefix that is a whole number of (8, 128) tiles, so it
    # reshapes to a lane-dense (rows, 128) layout with no padding copy.
    n_main = (n // TILE) * TILE

    if n_main > 0:
        p_main = flat_p if n_main == n else flat_p[:n_main]
        t_main = flat_t if n_main == n else flat_t[:n_main]
        rows = n_main // LANES
        sums = _main_partials(p_main.reshape(rows, LANES),
                              t_main.reshape(rows, LANES),
                              n_main, max_block_rows)
        inter, sum_p, sum_t, bce_sum = sums[0], sums[1], sums[2], sums[3]
    else:
        inter = sum_p = sum_t = bce_sum = jnp.float32(0.0)

    if n_main < n:
        # Ragged tail (< 1024 elements): negligible work, plain JAX.
        p_tail = flat_p[n_main:].astype(jnp.float32)
        t_tail = flat_t[n_main:].astype(jnp.float32)
        inter = inter + jnp.sum(p_tail * t_tail)
        sum_p = sum_p + jnp.sum(p_tail)
        sum_t = sum_t + jnp.sum(t_tail)
        log_p = jnp.maximum(jnp.log(p_tail), -100.0)
        log_1mp = jnp.maximum(jnp.log(1.0 - p_tail), -100.0)
        bce_sum = bce_sum + jnp.sum(-(t_tail * (log_p - log_1mp) + log_1mp))

    smooth = 1.0
    dice = (2.0 * inter + smooth) / (sum_p + sum_t + smooth)
    bce_mean = bce_sum / jnp.float32(n)
    return 0.5 * (1.0 - dice) + 0.5 * bce_mean


def _reference_loss(y_pred, y_true):
    p = y_pred.reshape(-1).astype(jnp.float32)
    t = y_true.reshape(-1).astype(jnp.float32)
    smooth = 1.0
    inter = jnp.sum(p * t)
    dice = (2.0 * inter + smooth) / (jnp.sum(p) + jnp.sum(t) + smooth)
    log_p = jnp.maximum(jnp.log(p), -100.0)
    log_1mp = jnp.maximum(jnp.log(1.0 - p), -100.0)
    bce = jnp.mean(-(t * log_p + (1.0 - t) * log_1mp))
    return 0.5 * (1.0 - dice) + 0.5 * bce


def _make_inputs(key, shape):
    k1, k2 = jax.random.split(key)
    # y_pred must be probabilities in (0, 1) for binary_cross_entropy.
    y_pred = jax.nn.sigmoid(jax.random.normal(k1, shape, dtype=jnp.float32))
    y_true = jax.random.bernoulli(k2, 0.5, shape).astype(jnp.float32)
    return y_pred, y_true


if __name__ == "__main__":
    key = jax.random.PRNGKey(0)

    # 1) Main case (NCHW, divides (8,128) tiles exactly -> pure fast path).
    y_pred, y_true = _make_inputs(key, (2, 4, 16, 16))
    loss = dice_bce_loss(y_pred, y_true)
    jax.block_until_ready(loss)
    ref = _reference_loss(y_pred, y_true)
    assert jnp.allclose(loss, ref, rtol=1e-5, atol=1e-5), (loss, ref)

    # 2) Ragged size -> exercises the JAX tail reduction (no padding copy).
    y_pred, y_true = _make_inputs(jax.random.PRNGKey(1), (2, 3, 17, 19))
    loss = dice_bce_loss(y_pred, y_true)
    jax.block_until_ready(loss)
    ref = _reference_loss(y_pred, y_true)
    assert jnp.allclose(loss, ref, rtol=1e-5, atol=1e-5), (loss, ref)

    # 3) Small block cap -> exercises the dual-core split, the clamped
    #    index_map and the masked (duplicated-block) path.
    y_pred, y_true = _make_inputs(jax.random.PRNGKey(2), (2, 4, 24, 32))
    loss = dice_bce_loss(y_pred, y_true, max_block_rows=16)
    jax.block_until_ready(loss)
    ref = _reference_loss(y_pred, y_true)
    assert jnp.allclose(loss, ref, rtol=1e-5, atol=1e-5), (loss, ref)

    print("KERNEL_OK")
</pallas_src>

<mosaic_0001>
module attributes {stable_mosaic.version = 11 : i64} {
  func.func @_dice_bce_partials_kernel(%arg0: i32, %arg1: i32, %arg2: memref<16x128xf32, #tpu.memory_space<vmem>>, %arg3: memref<16x128xf32, #tpu.memory_space<vmem>>, %arg4: memref<1x4x8x128xf32, #tpu.memory_space<vmem>>) attributes {dimension_semantics = [#tpu.dimension_semantics<parallel>, #tpu.dimension_semantics<arbitrary>], iteration_bounds = array<i64: 1, 1>, scalar_prefetch = 0 : i64, scratch_operands = 0 : i64, tpu.core_type = #tpu.core_type<tc>, window_params = [{transform_indices = @transform_0, window_bounds = array<i64: 16, 128>}, {transform_indices = @transform_1, window_bounds = array<i64: 16, 128>}, {transform_indices = @transform_2, window_bounds = array<i64: 1, 4, 8, 128>}]} {
    %c0_i32 = arith.constant 0 : i32
    %0 = arith.cmpi eq, %arg1, %c0_i32 : i32
    %1 = arith.extui %0 : i1 to i32
    %c0_i32_0 = arith.constant 0 : i32
    %2 = arith.cmpi ne, %1, %c0_i32_0 : i32
    scf.if %2 {
      %cst_44 = arith.constant 0.000000e+00 : f32
      %59 = vector.broadcast %cst_44 : f32 to vector<1x4x8x128xf32>
      %c0_45 = arith.constant 0 : index
      %c0_46 = arith.constant 0 : index
      %c0_47 = arith.constant 0 : index
      %c0_48 = arith.constant 0 : index
      %60 = vector.load %arg4[%c0_45, %c0_46, %c0_47, %c0_48] : memref<1x4x8x128xf32, #tpu.memory_space<vmem>>, vector<1x4x8x128xf32>
      tpu.vector_store %arg4[%c0_45, %c0_46, %c0_47, %c0_48], %59 {strides = array<i32>} : memref<1x4x8x128xf32, #tpu.memory_space<vmem>>, vector<1x4x8x128xf32>,
    } else {
    }
    %cst = arith.constant 0.000000e+00 : f32
    %3 = vector.broadcast %cst : f32 to vector<8x128xf32>
    %cst_1 = arith.constant 0.000000e+00 : f32
    %4 = vector.broadcast %cst_1 : f32 to vector<8x128xf32>
    %cst_2 = arith.constant 0.000000e+00 : f32
    %5 = vector.broadcast %cst_2 : f32 to vector<8x128xf32>
    %cst_3 = arith.constant 0.000000e+00 : f32
    %6 = vector.broadcast %cst_3 : f32 to vector<8x128xf32>
    %c0 = arith.constant 0 : index
    %c0_4 = arith.constant 0 : index
    %7 = vector.load %arg2[%c0, %c0_4] : memref<16x128xf32, #tpu.memory_space<vmem>>, vector<16x128xf32>
    %c0_5 = arith.constant 0 : index
    %c0_6 = arith.constant 0 : index
    %8 = vector.load %arg3[%c0_5, %c0_6] : memref<16x128xf32, #tpu.memory_space<vmem>>, vector<16x128xf32>
    %9 = math.log %7 : vector<16x128xf32>
    %cst_7 = arith.constant -1.000000e+02 : f32
    %10 = vector.broadcast %cst_7 : f32 to vector<16x128xf32>
    %11 = arith.maximumf %9, %10 : vector<16x128xf32>
    %cst_8 = arith.constant 1.000000e+00 : f32
    %12 = vector.broadcast %cst_8 : f32 to vector<16x128xf32>
    %13 = arith.subf %12, %7 : vector<16x128xf32>
    %14 = math.log %13 : vector<16x128xf32>
    %cst_9 = arith.constant -1.000000e+02 : f32
    %15 = vector.broadcast %cst_9 : f32 to vector<16x128xf32>
    %16 = arith.maximumf %14, %15 : vector<16x128xf32>
    %17 = arith.subf %11, %16 : vector<16x128xf32>
    %18 = arith.mulf %8, %17 : vector<16x128xf32>
    %19 = arith.addf %18, %16 : vector<16x128xf32>
    %cst_10 = arith.constant 0.000000e+00 : f32
    %20 = vector.broadcast %cst_10 : f32 to vector<16x128xf32>
    %21 = arith.subf %20, %19 : vector<16x128xf32>
    %22 = arith.mulf %7, %8 : vector<16x128xf32>
    %23 = vector.shape_cast %22 : vector<16x128xf32> to vector<2x8x128xf32>
    %cst_11 = arith.constant dense<0.000000e+00> : vector<8x128xf32>
    %24 = vector.multi_reduction <add>, %23, %cst_11 [0] : vector<2x8x128xf32> to vector<8x128xf32>
    %25 = vector.shape_cast %7 : vector<16x128xf32> to vector<2x8x128xf32>
    %cst_12 = arith.constant dense<0.000000e+00> : vector<8x128xf32>
    %26 = vector.multi_reduction <add>, %25, %cst_12 [0] : vector<2x8x128xf32> to vector<8x128xf32>
    %27 = vector.shape_cast %8 : vector<16x128xf32> to vector<2x8x128xf32>
    %cst_13 = arith.constant dense<0.000000e+00> : vector<8x128xf32>
    %28 = vector.multi_reduction <add>, %27, %cst_13 [0] : vector<2x8x128xf32> to vector<8x128xf32>
    %29 = vector.shape_cast %21 : vector<16x128xf32> to vector<2x8x128xf32>
    %cst_14 = arith.constant dense<0.000000e+00> : vector<8x128xf32>
    %30 = vector.multi_reduction <add>, %29, %cst_14 [0] : vector<2x8x128xf32> to vector<8x128xf32>
    %31 = arith.addf %3, %24 : vector<8x128xf32>
    %32 = arith.addf %4, %26 : vector<8x128xf32>
    %33 = arith.addf %5, %28 : vector<8x128xf32>
    %34 = arith.addf %6, %30 : vector<8x128xf32>
    %c0_15 = arith.constant 0 : index
    %c0_16 = arith.constant 0 : index
    %c0_17 = arith.constant 0 : index
    %c0_18 = arith.constant 0 : index
    %35 = vector.load %arg4[%c0_15, %c0_16, %c0_17, %c0_18] : memref<1x4x8x128xf32, #tpu.memory_space<vmem>>, vector<1x1x8x128xf32>
    %36 = vector.shape_cast %35 : vector<1x1x8x128xf32> to vector<8x128xf32>
    %37 = arith.addf %36, %31 : vector<8x128xf32>
    %c0_19 = arith.constant 0 : index
    %c0_20 = arith.constant 0 : index
    %c0_21 = arith.constant 0 : index
    %c0_22 = arith.constant 0 : index
    %38 = vector.load %arg4[%c0_19, %c0_20, %c0_21, %c0_22] : memref<1x4x8x128xf32, #tpu.memory_space<vmem>>, vector<1x1x8x128xf32>
    %39 = vector.shape_cast %38 : vector<1x1x8x128xf32> to vector<8x128xf32>
    %40 = vector.shape_cast %37 : vector<8x128xf32> to vector<1x1x8x128xf32>
    tpu.vector_store %arg4[%c0_19, %c0_20, %c0_21, %c0_22], %40 {strides = array<i32>} : memref<1x4x8x128xf32, #tpu.memory_space<vmem>>, vector<1x1x8x128xf32>,
    %c0_23 = arith.constant 0 : index
    %c1 = arith.constant 1 : index
    %c0_24 = arith.constant 0 : index
    %c0_25 = arith.constant 0 : index
    %41 = vector.load %arg4[%c0_23, %c1, %c0_24, %c0_25] : memref<1x4x8x128xf32, #tpu.memory_space<vmem>>, vector<1x1x8x128xf32>
    %42 = vector.shape_cast %41 : vector<1x1x8x128xf32> to vector<8x128xf32>
    %43 = arith.addf %42, %32 : vector<8x128xf32>
    %c0_26 = arith.constant 0 : index
    %c1_27 = arith.constant 1 : index
    %c0_28 = arith.constant 0 : index
    %c0_29 = arith.constant 0 : index
    %44 = vector.load %arg4[%c0_26, %c1_27, %c0_28, %c0_29] : memref<1x4x8x128xf32, #tpu.memory_space<vmem>>, vector<1x1x8x128xf32>
    %45 = vector.shape_cast %44 : vector<1x1x8x128xf32> to vector<8x128xf32>
    %46 = vector.shape_cast %43 : vector<8x128xf32> to vector<1x1x8x128xf32>
    tpu.vector_store %arg4[%c0_26, %c1_27, %c0_28, %c0_29], %46 {strides = array<i32>} : memref<1x4x8x128xf32, #tpu.memory_space<vmem>>, vector<1x1x8x128xf32>,
    %c0_30 = arith.constant 0 : index
    %c2 = arith.constant 2 : index
    %c0_31 = arith.constant 0 : index
    %c0_32 = arith.constant 0 : index
    %47 = vector.load %arg4[%c0_30, %c2, %c0_31, %c0_32] : memref<1x4x8x128xf32, #tpu.memory_space<vmem>>, vector<1x1x8x128xf32>
    %48 = vector.shape_cast %47 : vector<1x1x8x128xf32> to vector<8x128xf32>
    %49 = arith.addf %48, %33 : vector<8x128xf32>
    %c0_33 = arith.constant 0 : index
    %c2_34 = arith.constant 2 : index
    %c0_35 = arith.constant 0 : index
    %c0_36 = arith.constant 0 : index
    %50 = vector.load %arg4[%c0_33, %c2_34, %c0_35, %c0_36] : memref<1x4x8x128xf32, #tpu.memory_space<vmem>>, vector<1x1x8x128xf32>
    %51 = vector.shape_cast %50 : vector<1x1x8x128xf32> to vector<8x128xf32>
    %52 = vector.shape_cast %49 : vector<8x128xf32> to vector<1x1x8x128xf32>
    tpu.vector_store %arg4[%c0_33, %c2_34, %c0_35, %c0_36], %52 {strides = array<i32>} : memref<1x4x8x128xf32, #tpu.memory_space<vmem>>, vector<1x1x8x128xf32>,
    %c0_37 = arith.constant 0 : index
    %c3 = arith.constant 3 : index
    %c0_38 = arith.constant 0 : index
    %c0_39 = arith.constant 0 : index
    %53 = vector.load %arg4[%c0_37, %c3, %c0_38, %c0_39] : memref<1x4x8x128xf32, #tpu.memory_space<vmem>>, vector<1x1x8x128xf32>
    %54 = vector.shape_cast %53 : vector<1x1x8x128xf32> to vector<8x128xf32>
    %55 = arith.addf %54, %34 : vector<8x128xf32>
    %c0_40 = arith.constant 0 : index
    %c3_41 = arith.constant 3 : index
    %c0_42 = arith.constant 0 : index
    %c0_43 = arith.constant 0 : index
    %56 = vector.load %arg4[%c0_40, %c3_41, %c0_42, %c0_43] : memref<1x4x8x128xf32, #tpu.memory_space<vmem>>, vector<1x1x8x128xf32>
    %57 = vector.shape_cast %56 : vector<1x1x8x128xf32> to vector<8x128xf32>
    %58 = vector.shape_cast %55 : vector<8x128xf32> to vector<1x1x8x128xf32>
    tpu.vector_store %arg4[%c0_40, %c3_41, %c0_42, %c0_43], %58 {strides = array<i32>} : memref<1x4x8x128xf32, #tpu.memory_space<vmem>>, vector<1x1x8x128xf32>,
    return
  }
  func.func @transform_0(%arg0: i32, %arg1: i32) -> (i32, i32) {
    %c1_i32 = arith.constant 1 : i32
    %0 = arith.muli %arg0, %c1_i32 : i32
    %1 = arith.addi %0, %arg1 : i32
    %c0_i32 = arith.constant 0 : i32
    %2 = arith.minsi %1, %c0_i32 : i32
    %c0_i32_0 = arith.constant 0 : i32
    %c0_i32_1 = arith.constant 0 : i32
    return %2, %c0_i32_0 : i32, i32
  }
  func.func @transform_1(%arg0: i32, %arg1: i32) -> (i32, i32) {
    %c1_i32 = arith.constant 1 : i32
    %0 = arith.muli %arg0, %c1_i32 : i32
    %1 = arith.addi %0, %arg1 : i32
    %c0_i32 = arith.constant 0 : i32
    %2 = arith.minsi %1, %c0_i32 : i32
    %c0_i32_0 = arith.constant 0 : i32
    %c0_i32_1 = arith.constant 0 : i32
    return %2, %c0_i32_0 : i32, i32
  }
  func.func @transform_2(%arg0: i32, %arg1: i32) -> (i32, i32, i32, i32) {
    %c0_i32 = arith.constant 0 : i32
    %c0_i32_0 = arith.constant 0 : i32
    %c0_i32_1 = arith.constant 0 : i32
    %c0_i32_2 = arith.constant 0 : i32
    return %arg0, %c0_i32, %c0_i32_0, %c0_i32_1 : i32, i32, i32, i32
  }
}

</mosaic_0001>

<llo_original>
// kernel: tpu_custom_call.1
$region0: #{tpu_custom_call.1}
  #allocation0 [shape = 'u32[]', space=smem, size = 0x4, offset = 0x4, fixed_abs, tag = 'smem constant byte address 0x4 - core index']
  #allocation1 [shape = 'u32[144,128]{1,0:T(1,128)}', space=vmem, size = 0x12000, scoped, tag = 'internal scratch']
  %s0 = inlined_call_operand.hbm [shape: f32[16,128], index: 0, kind: input, shape index: {}]
  %s1 = inlined_call_operand.hbm [shape: f32[16,128], index: 1, kind: input, shape index: {}]
  %s2 = inlined_call_operand.hbm [shape: f32[1,4,8,128], index: 2, kind: output, shape index: {}]
  %s3 = sld [smem:[#allocation0]]
  $region30: #{tpu_custom_call.1} parent=0
    _
  %s5 = ssub.s32 1, %s3
  %s6 = scalar_select 0, %s5, %s3
  $region1: #{tpu_custom_call.1} parent=0
    #allocation2 [shape = 'u8[8192]{0}', space=vmem, size = 0x2000, scoped, tag = 'input window, operand 0, single buffered']
    #allocation3 [shape = 's32[1]{0}', space=sflag, size = 0x4, scoped, tag = 'scoped memory for tpu_custom_call.1']
    #allocation4 [shape = 's32[1]{0}', space=sflag, size = 0x4, scoped, tag = 'scoped memory for tpu_custom_call.1']
    #allocation5 [shape = 'u8[8192]{0}', space=vmem, size = 0x2000, scoped, tag = 'input window, operand 1, single buffered']
    #allocation6 [shape = 's32[1]{0}', space=sflag, size = 0x4, scoped, tag = 'scoped memory for tpu_custom_call.1']
    #allocation7 [shape = 'u8[16384]{0}', space=vmem, size = 0x4000, scoped, tag = 'output window, operand 0, single buffered']
    %7 = vsyncpa [#allocation3], 0
    %8 = vsyncpa [#allocation6], 0
    %9 = vsyncpa [#allocation4], 0
    // Predicated region
    $region2: #{tpu_custom_call.1} parent=1 // pred_check
      _
    $region3: #{tpu_custom_call.1} parent=1 // pred_check_branch
      %11 = sbr.rel (0) target = $region5
    $region4: #{tpu_custom_call.1} parent=1 // pred_region
      %s12 = sadd.s32 0, 0
      %p13 = scmp.lt.s32.totalorder %s12, 0
      %s14 = scalar_select %p13, %s12, 0
      %s15 = smul.u32 2, %s14
      %s17 = ssub.s32 256, 256
      %18 = vsyncadd [#allocation3], %s17
      %s19 = smul.addr %s15, 128
      %s20 = scalar_lea.hbm %s0, %s19
      %s21 = sshll.u32 [#allocation2], 4
      %s22 = int_to_ptr.vmem [resolvable:$true] %s21
      %27 = dma.hbm_to_vmem [thread:$0]  %s20, 256, %s22, [#allocation3], 128, 128, 8
    $region5: #{tpu_custom_call.1} parent=1 // pred_fallthru
      _
    // Predicated region
    $region6: #{tpu_custom_call.1} parent=1 // pred_check
      _
    $region7: #{tpu_custom_call.1} parent=1 // pred_check_branch
      %29 = sbr.rel (0) target = $region9
    $region8: #{tpu_custom_call.1} parent=1 // pred_region
      %s30 = sadd.s32 0, 0
      %p31 = scmp.lt.s32.totalorder %s30, 0
      %s32 = scalar_select %p31, %s30, 0
      %s33 = smul.u32 2, %s32
      %s35 = ssub.s32 256, 256
      %36 = vsyncadd [#allocation6], %s35
      %s37 = smul.addr %s33, 128
      %s38 = scalar_lea.hbm %s1, %s37
      %s39 = sshll.u32 [#allocation5], 4
      %s40 = int_to_ptr.vmem [resolvable:$true] %s39
      %45 = dma.hbm_to_vmem [thread:$0]  %s38, 256, %s40, [#allocation6], 128, 128, 8
    $region9: #{tpu_custom_call.1} parent=1 // pred_fallthru
      _
    // Predicated region
    $region10: #{tpu_custom_call.1} parent=1 // pred_check
      _
    $region11: #{tpu_custom_call.1} parent=1 // pred_check_branch
      %47 = sbr.rel (0) target = $region13
    $region12: #{tpu_custom_call.1} parent=1 // pred_region
      %48 = dma.done [#allocation3], 256
    $region13: #{tpu_custom_call.1} parent=1 // pred_fallthru
      _
    // Predicated region
    $region14: #{tpu_custom_call.1} parent=1 // pred_check
      _
    $region15: #{tpu_custom_call.1} parent=1 // pred_check_branch
      %50 = sbr.rel (0) target = $region17
    $region16: #{tpu_custom_call.1} parent=1 // pred_region
      %51 = dma.done [#allocation6], 256
    $region17: #{tpu_custom_call.1} parent=1 // pred_fallthru
      _
    %s52 = sadd.s32 0, 0
    %p53 = scmp.lt.s32.totalorder %s52, 0
    %s54 = scalar_select %p53, %s52, 0
    %s55 = smul.u32 2, %s54
    %s56 = sadd.s32 0, 0
    %p57 = scmp.lt.s32.totalorder %s56, 0
    %s58 = scalar_select %p57, %s56, 0
    %s59 = smul.u32 2, %s58
    %p60 = scmp.eq.s32.totalorder 0, 0
    // Predicated region
    $region18: #{tpu_custom_call.1} parent=1 // pred_check
      %p61 = pneg %p60
    $region19: #{tpu_custom_call.1} parent=1 // pred_check_branch
      %63 = sbr.rel (%p61) target = $region21
    $region20: #{tpu_custom_call.1} parent=1 // pred_region
      %64 = vst [vmem:[#allocation7] sm:$0xff] 0.0
      %65 = vst [vmem:[#allocation7 + $0x8] sm:$0xff] 0.0
      %66 = vst [vmem:[#allocation7 + $0x10] sm:$0xff] 0.0
      %67 = vst [vmem:[#allocation7 + $0x18] sm:$0xff] 0.0
    $region21: #{tpu_custom_call.1} parent=1 // pred_fallthru
      _
    %v68 = vld [vmem:[#allocation2] sm:$0xff]
    %v69 = vld [vmem:[#allocation2 + $0x8] sm:$0xff]
    %v70 = vld [vmem:[#allocation5] sm:$0xff]
    %v71 = vld [vmem:[#allocation5 + $0x8] sm:$0xff]
    %v72 = vlog2.pop %v68
    %v73 = vmul.f32 %v72, 0.6931472
    %v74 = vlog2.pop %v69
    %v75 = vmul.f32 %v74, 0.6931472
    %v76 = vmax.f32 %v73, -100.0
    %v77 = vmax.f32 %v75, -100.0
    %v78 = vsub.f32 1.0, %v68
    %v79 = vsub.f32 1.0, %v69
    %v80 = vlog2.pop %v78
    %v81 = vmul.f32 %v80, 0.6931472
    %v82 = vlog2.pop %v79
    %v83 = vmul.f32 %v82, 0.6931472
    %v84 = vmax.f32 %v81, -100.0
    %v85 = vmax.f32 %v83, -100.0
    %v86 = vsub.f32 %v76, %v84
    %v87 = vsub.f32 %v77, %v85
    %v88 = vmul.f32 %v70, %v86
    %v89 = vmul.f32 %v71, %v87
    %v90 = vadd.f32 %v88, %v84
    %v91 = vadd.f32 %v89, %v85
    %v92 = vsub.f32 0.0, %v90
    %v93 = vsub.f32 0.0, %v91
    %v94 = vmul.f32 %v68, %v70
    %v95 = vmul.f32 %v69, %v71
    %v96 = vadd.f32 %v94, %v95
    %v97 = vadd.f32 %v68, %v69
    %v98 = vadd.f32 %v70, %v71
    %v99 = vadd.f32 %v92, %v93
    %v100 = vadd.f32 %v96, 0.0
    %v101 = vadd.f32 %v97, 0.0
    %v102 = vadd.f32 %v98, 0.0
    %v103 = vadd.f32 %v99, 0.0
    %v104 = vld [vmem:[#allocation7] sm:$0xff]
    %v105 = vadd.f32 %v104, %v100
    %106 = vst [vmem:[#allocation7] sm:$0xff] %v105
    %s107 = scalar_lea.vmem [#allocation7], 8
    %v108 = vld [vmem:[%s107] sm:$0xff]
    %v109 = vadd.f32 %v108, %v101
    %110 = vst [vmem:[%s107] sm:$0xff] %v109
    %s111 = scalar_lea.vmem [#allocation7], 16
    %v112 = vld [vmem:[%s111] sm:$0xff]
    %v113 = vadd.f32 %v112, %v102
    %114 = vst [vmem:[%s111] sm:$0xff] %v113
    %s115 = scalar_lea.vmem [#allocation7], 24
    %v116 = vld [vmem:[%s115] sm:$0xff]
    %v117 = vadd.f32 %v116, %v103
    %118 = vst [vmem:[%s115] sm:$0xff] %v117
    // Predicated region
    $region22: #{tpu_custom_call.1} parent=1 // pred_check
      _
    $region23: #{tpu_custom_call.1} parent=1 // pred_check_branch
      %120 = sbr.rel (0) target = $region25
    $region24: #{tpu_custom_call.1} parent=1 // pred_region
      %s122 = ssub.s32 512, 512
      %123 = vsyncadd [#allocation4], %s122
      %s124 = sshll.u32 [#allocation7], 4
      %s125 = int_to_ptr.vmem [resolvable:$true] %s124
      %130 = dma.vmem_to_hbm [thread:$0]  %s125, 512, %s2, [#allocation4], 128, 128, 8
    $region25: #{tpu_custom_call.1} parent=1 // pred_fallthru
      _
    // Predicated region
    $region26: #{tpu_custom_call.1} parent=1 // pred_check
      _
    $region27: #{tpu_custom_call.1} parent=1 // pred_check_branch
      %132 = sbr.rel (0) target = $region29
    $region28: #{tpu_custom_call.1} parent=1 // pred_region
      %133 = dma.done [#allocation4], 512
    $region29: #{tpu_custom_call.1} parent=1 // pred_fallthru
      _
    %134 = vsyncpa [#allocation3], 1
    %135 = vsyncpa [#allocation6], 1
    %136 = vsyncpa [#allocation4], 1

</llo_original>
